<compile_context>
chip_gen: v6e
topology: v6e:2x2x1
jax: 0.10.0
libtpu: 0.0.40
codegen_flags: <defaults>
</compile_context>

<pallas_src>
import functools

import jax
import jax.numpy as jnp
from jax.experimental import pallas as pl
from jax.experimental.pallas import tpu as pltpu


def _ls_ce_kernel(x_ref, lbl_ref, out_ref, *, lb_pos, lb_neg, lb_ignore,
                  s_total, ragged):
    x = x_ref[...].astype(jnp.float32)        # (C, TS)  in-VMEM upcast (free VPU)
    lbl = lbl_ref[...]                        # (1, TS)  int32
    C, ts = x.shape

    # Per-position statistics over the class (sublane) axis.
    m = jnp.max(x, axis=0, keepdims=True)                           # (1, TS)
    sum_x = jnp.sum(x, axis=0, keepdims=True)                       # (1, TS)
    lse = jnp.log(jnp.sum(jnp.exp(x - m), axis=0, keepdims=True))   # (1, TS)

    # x at the label class, gathered with a vectorized iota-compare.
    # NOTE: labels outside [0, C) that are not lb_ignore contribute
    # x_at_lbl = 0 instead of raising (torch's scatter_ would error).
    cls = jax.lax.broadcasted_iota(jnp.int32, x.shape, 0)           # (C, TS)
    x_at_lbl = jnp.sum(jnp.where(cls == lbl, x, 0.0), axis=0, keepdims=True)

    # Smoothed CE, algebraically reduced (no one-hot / target / log-prob
    # block temporaries):
    #   loss = T*(m + lse) - lb_neg*sum_x - (lb_pos - lb_neg)*x[label]
    # with T = lb_pos + (C-1)*lb_neg a compile-time constant.
    t_sum = lb_pos + (C - 1) * lb_neg
    loss = t_sum * (m + lse) - lb_neg * sum_x - (lb_pos - lb_neg) * x_at_lbl

    valid = lbl != lb_ignore
    if ragged:  # compile-time: only shapes that need the tail mask pay for it
        s = pl.program_id(1)
        pos = s * ts + jax.lax.broadcasted_iota(jnp.int32, lbl.shape, 1)
        valid = jnp.logical_and(valid, pos < s_total)
    # where (not multiply): garbage/NaN from the padded tail must not propagate
    loss = jnp.where(valid, loss, 0.0)
    cnt = valid.astype(jnp.float32)

    # Static tree-fold of the lane axis down to 128.  TS is a power-of-two
    # multiple of 128, so every halving stays 128-aligned: pure vreg adds,
    # no relayout, log2(TS/128) unrolled steps.
    def fold(v):
        w = v.shape[-1]
        while w > 128:
            h = w // 2
            v = v[:, :h] + v[:, h:w]
            w = h
        return v

    # Single lane-dense store of both partial rows.
    out_ref[...] = jnp.concatenate([fold(loss), fold(cnt)], axis=0)  # (2, 128)


def label_smooth_softmax_ce(logits, label, *, lb_pos=0.9, lb_neg=0.005,
                            lb_ignore=-1, reduction="mean",
                            target_block_bytes=4 << 20,
                            vmem_limit_bytes=48 << 20):
    """Forward of LabelSmoothSoftmaxCE on NCHW logits (reduction='mean'/'sum')."""
    N, C, H, W = logits.shape
    S = H * W
    itemsize = int(jnp.dtype(logits.dtype).itemsize)

    logits3 = logits.reshape(N, C, S)                  # free for contiguous NCHW
    label3 = label.astype(jnp.int32).reshape(N, 1, S)

    # --- spatial tile TS: a power-of-two multiple of 128 lanes ---------------
    s_pad = ((S + 127) // 128) * 128
    lanes = max(128, min(target_block_bytes // (C * 4), s_pad))
    ts = 128 << max(0, (lanes // 128).bit_length() - 1)   # round down to 128*2^k

    # VMEM budget: double-buffered input block + ~4 f32 block-sized values the
    # compiler may keep in VMEM (upcast x, exp(x-m), class iota, masked x).
    # 48 MiB scoped limit is safe on every generation (incl. v7x's 64 MiB VMEM).
    def _fits(t):
        return C * t * (4 * 4 + 2 * itemsize) + 16 * t <= int(0.9 * vmem_limit_bytes)
    while ts > 128 and not _fits(ts):
        ts //= 2
    if not _fits(ts):
        # TODO(synk): class-tiled / online-softmax variant for very large C.
        raise ValueError(f"channel dim C={C} too large for single-pass VMEM budget")

    # Megacore: give dual-TensorCore chips at least ~4 independent grid steps.
    while N * pl.cdiv(S, ts) < 4 and ts > 128:
        ts //= 2

    s_tiles = pl.cdiv(S, ts)
    ragged = (s_tiles * ts != S)

    kernel = functools.partial(
        _ls_ce_kernel, lb_pos=float(lb_pos), lb_neg=float(lb_neg),
        lb_ignore=int(lb_ignore), s_total=S, ragged=ragged)

    partials = pl.pallas_call(
        kernel,
        out_shape=jax.ShapeDtypeStruct((N, s_tiles, 2, 128), jnp.float32),
        grid_spec=pltpu.PrefetchScalarGridSpec(
            num_scalar_prefetch=0,
            grid=(N, s_tiles),
            in_specs=[
                # native layout: N squeezed, full C (sublanes), S tiled on lanes
                pl.BlockSpec((None, C, ts), lambda n, s: (n, 0, s)),
                pl.BlockSpec((None, 1, ts), lambda n, s: (n, 0, s)),
            ],
            # one lane-dense (2,128) partial per grid point -> no carried state
            out_specs=pl.BlockSpec((None, None, 2, 128), lambda n, s: (n, s, 0, 0)),
        ),
        compiler_params=pltpu.CompilerParams(
            dimension_semantics=("parallel", "parallel"),
            vmem_limit_bytes=int(vmem_limit_bytes),
        ),
    )(logits3, label3)

    loss_sum = jnp.sum(partials[:, :, 0, :])
    n_valid = jnp.sum(partials[:, :, 1, :])
    if reduction == "mean":
        # NOTE: if every label == lb_ignore this is x/0 (inf/NaN), same as torch.
        return loss_sum / n_valid
    elif reduction == "sum":
        return loss_sum
    else:
        # TODO(synk): reduction='none' (per-pixel (N,H,W) loss output) not implemented.
        raise NotImplementedError("reduction='none' is not implemented")


def _reference(logits, label, lb_pos=0.9, lb_neg=0.005, lb_ignore=-1):
    """Pure-JAX reference matching the PyTorch forward (reduction='mean')."""
    logs = jax.nn.log_softmax(logits.astype(jnp.float32), axis=1)
    C = logits.shape[1]
    one_hot = (label[:, None, :, :] ==
               jnp.arange(C, dtype=label.dtype)[None, :, None, None]
               ).astype(jnp.float32)
    target = lb_pos * one_hot + lb_neg * (1.0 - one_hot)
    loss = -jnp.sum(logs * target, axis=1)                   # (N, H, W)
    ignore = label == lb_ignore
    loss = jnp.where(ignore, 0.0, loss)
    n_valid = jnp.sum(~ignore)
    return jnp.sum(loss) / n_valid


if __name__ == "__main__":
    key = jax.random.PRNGKey(0)
    k_logits, k_label, k2_logits, k2_label = jax.random.split(key, 4)

    # Test 1: aligned spatial size (S = 256, multiple of 128).
    N, C, H, W = 2, 4, 16, 16
    logits = jax.random.normal(k_logits, (N, C, H, W), dtype=jnp.float32)
    label = jax.random.randint(k_label, (N, H, W), 0, C, dtype=jnp.int32)
    label = label.at[0, 0, :5].set(-1)      # some ignored positions
    label = label.at[1, 3, 7].set(-1)
    out = jax.block_until_ready(label_smooth_softmax_ce(logits, label))
    ref = jax.block_until_ready(_reference(logits, label))
    assert jnp.allclose(out, ref, rtol=1e-5, atol=1e-5), (out, ref)

    # Test 2: ragged spatial size (S = 144, not a multiple of the tile).
    N2, C2, H2, W2 = 2, 4, 12, 12
    logits2 = jax.random.normal(k2_logits, (N2, C2, H2, W2), dtype=jnp.float32)
    label2 = jax.random.randint(k2_label, (N2, H2, W2), 0, C2, dtype=jnp.int32)
    label2 = label2.at[0, 1, 2].set(-1)
    out2 = jax.block_until_ready(label_smooth_softmax_ce(logits2, label2))
    ref2 = jax.block_until_ready(_reference(logits2, label2))
    assert jnp.allclose(out2, ref2, rtol=1e-5, atol=1e-5), (out2, ref2)

    print("KERNEL_OK")
</pallas_src>

<mosaic_0001>
module attributes {stable_mosaic.version = 11 : i64} {
  func.func @_ls_ce_kernel(%arg0: i32, %arg1: i32, %arg2: memref<1x4x128xf32, #tpu.memory_space<vmem>>, %arg3: memref<1x1x128xi32, #tpu.memory_space<vmem>>, %arg4: memref<1x1x2x128xf32, #tpu.memory_space<vmem>>) attributes {dimension_semantics = [#tpu.dimension_semantics<parallel>, #tpu.dimension_semantics<parallel>], iteration_bounds = array<i64: 2, 2>, scalar_prefetch = 0 : i64, scratch_operands = 0 : i64, tpu.core_type = #tpu.core_type<tc>, window_params = [{transform_indices = @transform_0, window_bounds = array<i64: 1, 4, 128>}, {transform_indices = @transform_1, window_bounds = array<i64: 1, 1, 128>}, {transform_indices = @transform_2, window_bounds = array<i64: 1, 1, 2, 128>}]} {
    %c0 = arith.constant 0 : index
    %c0_0 = arith.constant 0 : index
    %c0_1 = arith.constant 0 : index
    %0 = vector.load %arg2[%c0, %c0_0, %c0_1] : memref<1x4x128xf32, #tpu.memory_space<vmem>>, vector<1x4x128xf32>
    %1 = vector.shape_cast %0 : vector<1x4x128xf32> to vector<4x128xf32>
    %c0_2 = arith.constant 0 : index
    %c0_3 = arith.constant 0 : index
    %c0_4 = arith.constant 0 : index
    %2 = vector.load %arg3[%c0_2, %c0_3, %c0_4] : memref<1x1x128xi32, #tpu.memory_space<vmem>>, vector<1x1x128xi32>
    %3 = vector.shape_cast %2 : vector<1x1x128xi32> to vector<1x128xi32>
    %cst = arith.constant dense<0xFF800000> : vector<128xf32>
    %4 = vector.multi_reduction <maximumf>, %1, %cst [0] : vector<4x128xf32> to vector<128xf32>
    %5 = vector.shape_cast %4 : vector<128xf32> to vector<1x128xf32>
    %cst_5 = arith.constant dense<0.000000e+00> : vector<128xf32>
    %6 = vector.multi_reduction <add>, %1, %cst_5 [0] : vector<4x128xf32> to vector<128xf32>
    %7 = vector.shape_cast %6 : vector<128xf32> to vector<1x128xf32>
    %8 = vector.broadcast %5 : vector<1x128xf32> to vector<4x128xf32>
    %9 = arith.subf %1, %8 : vector<4x128xf32>
    %10 = math.exp %9 : vector<4x128xf32>
    %cst_6 = arith.constant dense<0.000000e+00> : vector<128xf32>
    %11 = vector.multi_reduction <add>, %10, %cst_6 [0] : vector<4x128xf32> to vector<128xf32>
    %12 = vector.shape_cast %11 : vector<128xf32> to vector<1x128xf32>
    %13 = math.log %12 : vector<1x128xf32>
    %14 = tpu.iota {dimensions = array<i32: 0>} : vector<4x128xi32>
    %15 = vector.broadcast %3 : vector<1x128xi32> to vector<4x128xi32>
    %16 = arith.cmpi eq, %14, %15 : vector<4x128xi32>
    %cst_7 = arith.constant 0.000000e+00 : f32
    %17 = vector.broadcast %cst_7 : f32 to vector<4x128xf32>
    %18 = arith.select %16, %1, %17 : vector<4x128xi1>, vector<4x128xf32>
    %cst_8 = arith.constant dense<0.000000e+00> : vector<128xf32>
    %19 = vector.multi_reduction <add>, %18, %cst_8 [0] : vector<4x128xf32> to vector<128xf32>
    %20 = vector.shape_cast %19 : vector<128xf32> to vector<1x128xf32>
    %21 = arith.addf %5, %13 : vector<1x128xf32>
    %cst_9 = arith.constant 9.150000e-01 : f32
    %22 = vector.broadcast %cst_9 : f32 to vector<1x128xf32>
    %23 = arith.mulf %22, %21 : vector<1x128xf32>
    %cst_10 = arith.constant 5.000000e-03 : f32
    %24 = vector.broadcast %cst_10 : f32 to vector<1x128xf32>
    %25 = arith.mulf %24, %7 : vector<1x128xf32>
    %26 = arith.subf %23, %25 : vector<1x128xf32>
    %cst_11 = arith.constant 0.89499998 : f32
    %27 = vector.broadcast %cst_11 : f32 to vector<1x128xf32>
    %28 = arith.mulf %27, %20 : vector<1x128xf32>
    %29 = arith.subf %26, %28 : vector<1x128xf32>
    %c-1_i32 = arith.constant -1 : i32
    %30 = vector.broadcast %c-1_i32 : i32 to vector<1x128xi32>
    %31 = arith.cmpi ne, %3, %30 : vector<1x128xi32>
    %cst_12 = arith.constant 0.000000e+00 : f32
    %32 = vector.broadcast %cst_12 : f32 to vector<1x128xf32>
    %33 = arith.select %31, %29, %32 : vector<1x128xi1>, vector<1x128xf32>
    %34 = arith.extui %31 : vector<1x128xi1> to vector<1x128xi32>
    %35 = arith.sitofp %34 : vector<1x128xi32> to vector<1x128xf32>
    %36 = tpu.concatenate %33, %35 in 0 : vector<1x128xf32>, vector<1x128xf32> -> vector<2x128xf32>
    %c0_13 = arith.constant 0 : index
    %c0_14 = arith.constant 0 : index
    %c0_15 = arith.constant 0 : index
    %c0_16 = arith.constant 0 : index
    %37 = vector.load %arg4[%c0_13, %c0_14, %c0_15, %c0_16] : memref<1x1x2x128xf32, #tpu.memory_space<vmem>>, vector<1x1x2x128xf32>
    %38 = vector.shape_cast %37 : vector<1x1x2x128xf32> to vector<2x128xf32>
    %39 = vector.shape_cast %36 : vector<2x128xf32> to vector<1x1x2x128xf32>
    tpu.vector_store %arg4[%c0_13, %c0_14, %c0_15, %c0_16], %39 {strides = array<i32>} : memref<1x1x2x128xf32, #tpu.memory_space<vmem>>, vector<1x1x2x128xf32>,
    return
  }
  func.func @transform_0(%arg0: i32, %arg1: i32) -> (i32, i32, i32) {
    %c0_i32 = arith.constant 0 : i32
    %c0_i32_0 = arith.constant 0 : i32
    return %arg0, %c0_i32, %arg1 : i32, i32, i32
  }
  func.func @transform_1(%arg0: i32, %arg1: i32) -> (i32, i32, i32) {
    %c0_i32 = arith.constant 0 : i32
    %c0_i32_0 = arith.constant 0 : i32
    return %arg0, %c0_i32, %arg1 : i32, i32, i32
  }
  func.func @transform_2(%arg0: i32, %arg1: i32) -> (i32, i32, i32, i32) {
    %c0_i32 = arith.constant 0 : i32
    %c0_i32_0 = arith.constant 0 : i32
    %c0_i32_1 = arith.constant 0 : i32
    return %arg0, %arg1, %c0_i32, %c0_i32_0 : i32, i32, i32, i32
  }
}

</mosaic_0001>

<llo_original>
// kernel: tpu_custom_call.1
$region0: #{tpu_custom_call.1}
  #allocation0 [shape = 'u32[]', space=smem, size = 0x4, offset = 0x4, fixed_abs, tag = 'smem constant byte address 0x4 - core index']
  #allocation1 [shape = 'u32[144,128]{1,0:T(1,128)}', space=vmem, size = 0x12000, scoped, tag = 'internal scratch']
  %s0 = inlined_call_operand.hbm [shape: f32[2,4,256], index: 0, kind: input, shape index: {}]
  %s1 = inlined_call_operand.hbm [shape: s32[2,1,256], index: 1, kind: input, shape index: {}]
  %s2 = inlined_call_operand.hbm [shape: f32[2,2,2,128], index: 2, kind: output, shape index: {}]
  %s3 = sld [smem:[#allocation0]]
  $region49: #{tpu_custom_call.1} parent=0
    _
  %s5 = ssub.s32 1, %s3
  %s6 = scalar_select 0, %s5, %s3
  $region1: #{tpu_custom_call.1} parent=0
    #allocation2 [shape = 'u8[4096]{0}', space=vmem, size = 0x1000, scoped, tag = 'input window, operand 0']
    #allocation3 [shape = 's32[2]{0}', space=sflag, size = 0x8, scoped, tag = 'scoped memory for tpu_custom_call.1']
    #allocation4 [shape = 's32[2]{0}', space=sflag, size = 0x8, scoped, tag = 'scoped memory for tpu_custom_call.1']
    #allocation5 [shape = 'u8[1024]{0}', space=vmem, size = 0x400, scoped, tag = 'input window, operand 1']
    #allocation6 [shape = 's32[2]{0}', space=sflag, size = 0x8, scoped, tag = 'scoped memory for tpu_custom_call.1']
    #allocation7 [shape = 'u8[2048]{0}', space=vmem, size = 0x800, scoped, tag = 'output window, operand 0']
    %7 = vsyncpa [#allocation3], 0
    %s8 = scalar_lea.sflag [#allocation3], 1
    %9 = vsyncpa %s8, 0
    %10 = vsyncpa [#allocation6], 0
    %s11 = scalar_lea.sflag [#allocation6], 1
    %12 = vsyncpa %s11, 0
    %13 = vsyncpa [#allocation4], 0
    %s14 = scalar_lea.sflag [#allocation4], 1
    %15 = vsyncpa %s14, 0
    loop: start=0, step=1, limit=6
    $region2: #{tpu_custom_call.1} parent=1 // loop_pre_header
      _
    $region3: #{tpu_custom_call.1} parent=1 // loop_header
      %s17 = sphi 0, %s21
      %p18 = scmp.ge.s32.totalorder %s17, 6
      %s24 = sphi 0, %s36
      %s25 = sphi 0, %s32
      %s26 = sphi 0, %s24
      %s27 = sphi 0, %s25
      %s28 = sphi 0, %s26
      %s29 = sphi 0, %s27
      %s41 = sphi 0, %s43
      %s44 = sphi 0, %s41
      %s45 = sphi 0, %s44
      %s61 = sphi 0, %s45
      %s69 = sphi 0, %s71
      %s72 = sphi 0, %s69
      %s73 = sphi 0, %s72
      %s89 = sphi 0, %s73
      %s97 = sphi 0, %s99
      %s100 = sphi 0, %s97
      %s101 = sphi 0, %s100
      %s117 = sphi 0, %s101
    $region4: #{tpu_custom_call.1} parent=1 // loop_header_branch
      %20 = sbr.rel (%p18) target = $region8
    $region5: #{tpu_custom_call.1} parent=1 // loop_body
      %s22 = ssub.s32 %s17, 1
      %s23 = ssub.s32 %s17, 2
      %s30 = sadd.s32 1, %s25
      %p31 = scmp.ge.s32.totalorder %s30, 2
      %s32 = scalar_select %p31, 0, %s30
      %s33 = sadd.s32 1, %s24
      %s34 = scalar_select %p31, %s33, %s24
      %p35 = scmp.ge.s32.totalorder %s34, 2
      %s36 = scalar_select %p35, 0, %s34
      %s37 = ssub.s32 %s24, %s36
      %s38 = ssub.s32 %s25, %s32
      %s39 = sor.u32 %s37, %s38
      %p40 = scmp.eq.s32.totalorder %s39, 0
      %s42 = sadd.s32 %s41, 1
      %s43 = scalar_select %p40, %s41, %s42
      %p46 = pneg %p40
      %p47 = scmp.eq.s32.totalorder %s17, 3
      %p48 = por %p46, %p47
      %p49 = scmp.ne.s32.totalorder %s41, %s44
      %p50 = scmp.eq.s32.totalorder %s17, 0
      %p51 = por %p49, %p50
      %p52 = scmp.ne.s32.totalorder %s41, %s44
      %p53 = scmp.eq.s32.totalorder %s22, 3
      %p54 = por %p52, %p53
      %p55 = scmp.ne.s32.totalorder %s44, %s45
      %p56 = scmp.eq.s32.totalorder %s22, 0
      %p57 = por %p55, %p56
      %p58 = scmp.ne.s32.totalorder %s44, %s45
      %p59 = scmp.eq.s32.totalorder %s23, 3
      %p60 = por %p58, %p59
      %p62 = scmp.ne.s32.totalorder %s45, %s61
      %p63 = scmp.eq.s32.totalorder %s23, 0
      %p64 = por %p62, %p63
      %s65 = ssub.s32 %s24, %s36
      %s66 = ssub.s32 %s25, %s32
      %s67 = sor.u32 %s65, %s66
      %p68 = scmp.eq.s32.totalorder %s67, 0
      %s70 = sadd.s32 %s69, 1
      %s71 = scalar_select %p68, %s69, %s70
      %p74 = pneg %p68
      %p75 = scmp.eq.s32.totalorder %s17, 3
      %p76 = por %p74, %p75
      %p77 = scmp.ne.s32.totalorder %s69, %s72
      %p78 = scmp.eq.s32.totalorder %s17, 0
      %p79 = por %p77, %p78
      %p80 = scmp.ne.s32.totalorder %s69, %s72
      %p81 = scmp.eq.s32.totalorder %s22, 3
      %p82 = por %p80, %p81
      %p83 = scmp.ne.s32.totalorder %s72, %s73
      %p84 = scmp.eq.s32.totalorder %s22, 0
      %p85 = por %p83, %p84
      %p86 = scmp.ne.s32.totalorder %s72, %s73
      %p87 = scmp.eq.s32.totalorder %s23, 3
      %p88 = por %p86, %p87
      %p90 = scmp.ne.s32.totalorder %s73, %s89
      %p91 = scmp.eq.s32.totalorder %s23, 0
      %p92 = por %p90, %p91
      %s93 = ssub.s32 %s24, %s36
      %s94 = ssub.s32 %s25, %s32
      %s95 = sor.u32 %s93, %s94
      %p96 = scmp.eq.s32.totalorder %s95, 0
      %s98 = sadd.s32 %s97, 1
      %s99 = scalar_select %p96, %s97, %s98
      %p102 = pneg %p96
      %p103 = scmp.eq.s32.totalorder %s17, 3
      %p104 = por %p102, %p103
      %p105 = scmp.ne.s32.totalorder %s97, %s100
      %p106 = scmp.eq.s32.totalorder %s17, 0
      %p107 = por %p105, %p106
      %p108 = scmp.ne.s32.totalorder %s97, %s100
      %p109 = scmp.eq.s32.totalorder %s22, 3
      %p110 = por %p108, %p109
      %p111 = scmp.ne.s32.totalorder %s100, %s101
      %p112 = scmp.eq.s32.totalorder %s22, 0
      %p113 = por %p111, %p112
      %p114 = scmp.ne.s32.totalorder %s100, %s101
      %p115 = scmp.eq.s32.totalorder %s23, 3
      %p116 = por %p114, %p115
      %p118 = scmp.ne.s32.totalorder %s101, %s117
      %p119 = scmp.eq.s32.totalorder %s23, 0
      %p120 = por %p118, %p119
      %p121 = scmp.le.s32.totalorder 1, %s17
      %p122 = scmp.lt.s32.totalorder %s17, 5
      %p123 = pnand %p121, %p122
      %p124 = pneg %p123
      // Predicated region
      $region9: #{tpu_custom_call.1} parent=5 // pred_check
        _
      $region10: #{tpu_custom_call.1} parent=5 // pred_check_branch
        %126 = sbr.rel (%p123) target = $region12
      $region11: #{tpu_custom_call.1} parent=5 // pred_region
        %s127 = ssub.s32 %s17, 1
      $region12: #{tpu_custom_call.1} parent=5 // pred_fallthru
        _
      %p128 = scmp.lt.s32.totalorder %s17, 4
      // Predicated region
      $region13: #{tpu_custom_call.1} parent=5 // pred_check
        %p129 = pneg %p128
      $region14: #{tpu_custom_call.1} parent=5 // pred_check_branch
        %131 = sbr.rel (%p129) target = $region16
      $region15: #{tpu_custom_call.1} parent=5 // pred_region
        // Predicated region
        $region17: #{tpu_custom_call.1} parent=15 // pred_check
          %p132 = pneg %p51
        $region18: #{tpu_custom_call.1} parent=15 // pred_check_branch
          %134 = sbr.rel (%p132) target = $region20
        $region19: #{tpu_custom_call.1} parent=15 // pred_region
          %s135 = sand.u32 %s41, 1
          %s136 = scalar_lea.sflag [#allocation3], %s135
          %s137 = sand.u32 %s41, 1
          %s138 = smul.addr %s137, 4
          %s139 = scalar_lea.vmem [#allocation2], %s138
          %s141 = ssub.s32 64, 64
          %142 = vsyncadd %s136, %s141
          %s143 = smul.addr %s24, 2
          %s144 = sadd.s32 %s25, %s143
          %s145 = smul.addr %s144, 64
          %s146 = scalar_lea.hbm %s0, %s145
          %s148 = sshll.u32 %s139, 4
          %s149 = int_to_ptr.vmem [resolvable:$true] %s148
          %151 = dma.hbm_to_vmem [thread:$0]  %s146, 64, %s149, %s136
        $region20: #{tpu_custom_call.1} parent=15 // pred_fallthru
          _
        // Predicated region
        $region21: #{tpu_custom_call.1} parent=15 // pred_check
          %p152 = pneg %p79
        $region22: #{tpu_custom_call.1} parent=15 // pred_check_branch
          %154 = sbr.rel (%p152) target = $region24
        $region23: #{tpu_custom_call.1} parent=15 // pred_region
          %s155 = sand.u32 %s69, 1
          %s156 = scalar_lea.sflag [#allocation6], %s155
          %s157 = sand.u32 %s69, 1
          %s158 = scalar_lea.vmem [#allocation5], %s157
          %s160 = ssub.s32 16, 16
          %161 = vsyncadd %s156, %s160
          %s162 = smul.addr %s24, 2
          %s163 = sadd.s32 %s25, %s162
          %s164 = smul.addr %s163, 16
          %s165 = scalar_lea.hbm %s1, %s164
          %s167 = sshll.u32 %s158, 4
          %s168 = int_to_ptr.vmem [resolvable:$true] %s167
          %170 = dma.hbm_to_vmem [thread:$0]  %s165, 16, %s168, %s156
        $region24: #{tpu_custom_call.1} parent=15 // pred_fallthru
          _
      $region16: #{tpu_custom_call.1} parent=5 // pred_fallthru
        _
      %p171 = scmp.le.s32.totalorder 1, %s17
      %p172 = scmp.lt.s32.totalorder %s17, 5
      %p173 = pnand %p171, %p172
      %p174 = pneg %p173
      // Predicated region
      $region25: #{tpu_custom_call.1} parent=5 // pred_check
        _
      $region26: #{tpu_custom_call.1} parent=5 // pred_check_branch
        %176 = sbr.rel (%p173) target = $region28
      $region27: #{tpu_custom_call.1} parent=5 // pred_region
        %s177 = ssub.s32 %s17, 1
        %s178 = sand.u32 %s44, 1
        %s179 = scalar_lea.sflag [#allocation3], %s178
        %s180 = sand.u32 %s44, 1
        %s181 = smul.addr %s180, 4
        %s182 = scalar_lea.vmem [#allocation2], %s181
        // Predicated region
        $region29: #{tpu_custom_call.1} parent=27 // pred_check
          %p183 = pneg %p57
        $region30: #{tpu_custom_call.1} parent=27 // pred_check_branch
          %185 = sbr.rel (%p183) target = $region32
        $region31: #{tpu_custom_call.1} parent=27 // pred_region
          %186 = dma.done %s179, 64
        $region32: #{tpu_custom_call.1} parent=27 // pred_fallthru
          _
        %s187 = sand.u32 %s72, 1
        %s188 = scalar_lea.sflag [#allocation6], %s187
        %s189 = sand.u32 %s72, 1
        %s190 = scalar_lea.vmem [#allocation5], %s189
        // Predicated region
        $region33: #{tpu_custom_call.1} parent=27 // pred_check
          %p191 = pneg %p85
        $region34: #{tpu_custom_call.1} parent=27 // pred_check_branch
          %193 = sbr.rel (%p191) target = $region36
        $region35: #{tpu_custom_call.1} parent=27 // pred_region
          %194 = dma.done %s188, 16
        $region36: #{tpu_custom_call.1} parent=27 // pred_fallthru
          _
        %s195 = sand.u32 %s44, 1
        %s196 = scalar_lea.sflag [#allocation3], %s195
        %s197 = sand.u32 %s44, 1
        %s198 = smul.addr %s197, 4
        %s199 = scalar_lea.vmem [#allocation2], %s198
        %p200 = pneg %p57
        %p201 = pneg %p54
        %s202 = sand.u32 %s72, 1
        %s203 = scalar_lea.sflag [#allocation6], %s202
        %s204 = sand.u32 %s72, 1
        %s205 = scalar_lea.vmem [#allocation5], %s204
        %p206 = pneg %p85
        %p207 = pneg %p82
        %p208 = pneg %p113
        %p209 = pneg %p110
        %s210 = sand.u32 %s100, 1
        %s211 = scalar_lea.sflag [#allocation4], %s210
        %s212 = sand.u32 %s100, 1
        %s213 = smul.addr %s212, 2
        %s214 = scalar_lea.vmem [#allocation7], %s213
        %v215 = vld [vmem:[%s182] sm:$0xf]
        %v216 = vld [vmem:[%s190] sm:$0x1]
        %vm217 = vcmask 1043456
        %v218 = vsel %vm217, %v215, -inf
        %v219 = vrot.slane %v218, 4
        %v220 = vmax.f32 %v218, %v219
        %v221 = vrot.slane %v220, 2
        %v222 = vmax.f32 %v220, %v221
        %v223 = vrot.slane %v222, 1
        %v224 = vmax.f32 %v222, %v223
        %v225 = vsel %vm217, %v215, 0.0
        %v226 = vrot.slane %v225, 4
        %v227 = vadd.f32 %v225, %v226
        %v228 = vrot.slane %v227, 2
        %v229 = vadd.f32 %v227, %v228
        %v230 = vrot.slane %v229, 1
        %v231 = vadd.f32 %v229, %v230
        %v232 = vsub.f32 %v215, %v224
        %v233 = vmul.f32 %v232, 1.442695
        %v234 = vpow.pop %v233
        %v235 = vsel %vm217, %v234, 0.0
        %v236 = vrot.slane %v235, 4
        %v237 = vadd.f32 %v235, %v236
        %v238 = vrot.slane %v237, 2
        %v239 = vadd.f32 %v237, %v238
        %v240 = vrot.slane %v239, 1
        %v241 = vadd.f32 %v239, %v240
        %v242 = vlog2.pop %v241
        %v243 = vmul.f32 %v242, 0.6931472
        %v244 = vlaneseq
        %v245 = vshrl.u32 %v244, 7
        %v246 = vlaneseq
        %v247 = vshrl.u32 %v246, 7
        %v248 = vsub.s32 0, %v247
        %v249 = vrot.slane %v216, %v248
        %vm250 = vcmp.eq.s32.totalorder %v245, %v249
        %v251 = vsel %vm250, %v215, 0.0
        %v252 = vsel %vm217, %v251, 0.0
        %v253 = vrot.slane %v252, 4
        %v254 = vadd.f32 %v252, %v253
        %v255 = vrot.slane %v254, 2
        %v256 = vadd.f32 %v254, %v255
        %v257 = vrot.slane %v256, 1
        %v258 = vadd.f32 %v256, %v257
        %v259 = vadd.f32 %v224, %v243
        %v260 = vmul.f32 %v259, 0.915
        %v261 = vmul.f32 %v231, 0.005
        %v262 = vsub.f32 %v260, %v261
        %v263 = vmul.f32 %v258, 0.895
        %v264 = vsub.f32 %v262, %v263
        %vm265 = vcmp.ne.s32.totalorder %v216, 4294967295
        %v266 = vsel %vm265, %v264, 0.0
        %v267 = vsel %vm265, 1, 0
        %v268 = vcvt.s32.f32 %v267
        %v270 = vlaneseq
        %v271 = vshrl.u32 %v270, 7
        %v272 = vsub.s32 0, %v271
        %v273 = vrot.slane %v268, %v272
        %vm275 = vcmask 1040384
        %v276 = vsel %vm275, %v266, %v273
        %277 = vst [vmem:[%s214] sm:$0x3] %v276
        %s278 = sand.u32 %s100, 1
        %s279 = scalar_lea.sflag [#allocation4], %s278
        %s280 = sand.u32 %s100, 1
        %s281 = smul.addr %s280, 2
        %s282 = scalar_lea.vmem [#allocation7], %s281
        // Predicated region
        $region37: #{tpu_custom_call.1} parent=27 // pred_check
          %p283 = pneg %p110
        $region38: #{tpu_custom_call.1} parent=27 // pred_check_branch
          %285 = sbr.rel (%p283) target = $region40
        $region39: #{tpu_custom_call.1} parent=27 // pred_region
          %s287 = ssub.s32 32, 32
          %288 = vsyncadd %s279, %s287
          %s289 = smul.addr %s26, 2
          %s290 = sadd.s32 %s27, %s289
          %s291 = smul.addr %s290, 32
          %s292 = scalar_lea.hbm %s2, %s291
          %s294 = sshll.u32 %s282, 4
          %s295 = int_to_ptr.vmem [resolvable:$true] %s294
          %297 = dma.vmem_to_hbm [thread:$0]  %s295, 32, %s292, %s279
        $region40: #{tpu_custom_call.1} parent=27 // pred_fallthru
          _
      $region28: #{tpu_custom_call.1} parent=5 // pred_fallthru
        _
      %p298 = scmp.le.s32.totalorder 2, %s17
      // Predicated region
      $region41: #{tpu_custom_call.1} parent=5 // pred_check
        %p299 = pneg %p298
      $region42: #{tpu_custom_call.1} parent=5 // pred_check_branch
        %301 = sbr.rel (%p299) target = $region44
      $region43: #{tpu_custom_call.1} parent=5 // pred_region
        %s302 = ssub.s32 %s17, 2
        // Predicated region
        $region45: #{tpu_custom_call.1} parent=43 // pred_check
          %p303 = pneg %p116
        $region46: #{tpu_custom_call.1} parent=43 // pred_check_branch
          %305 = sbr.rel (%p303) target = $region48
        $region47: #{tpu_custom_call.1} parent=43 // pred_region
          %s306 = sand.u32 %s101, 1
          %s307 = scalar_lea.sflag [#allocation4], %s306
          %s308 = sand.u32 %s101, 1
          %s309 = smul.addr %s308, 2
          %s310 = scalar_lea.vmem [#allocation7], %s309
          %311 = dma.done %s307, 32
        $region48: #{tpu_custom_call.1} parent=43 // pred_fallthru
          _
      $region44: #{tpu_custom_call.1} parent=5 // pred_fallthru
        _
    $region6: #{tpu_custom_call.1} parent=1 // loop_footer
      %s21 = sadd.s32 1, %s17
    $region7: #{tpu_custom_call.1} parent=1 // loop_footer_branch
      %16 = sbr.rel target = $region3
    $region8: #{tpu_custom_call.1} parent=1 // loop_exit
      _
    %312 = vsyncpa [#allocation3], 1
    %s313 = scalar_lea.sflag [#allocation3], 1
    %314 = vsyncpa %s313, 1
    %315 = vsyncpa [#allocation6], 1
    %s316 = scalar_lea.sflag [#allocation6], 1
    %317 = vsyncpa %s316, 1
    %318 = vsyncpa [#allocation4], 1
    %s319 = scalar_lea.sflag [#allocation4], 1
    %320 = vsyncpa %s319, 1

</llo_original>
